<compile_context>
chip_gen: v7x
topology: tpu7x:2x2x1
jax: 0.10.0
libtpu: 0.0.40
codegen_flags: <defaults>
</compile_context>

<pallas_src>
import jax
import jax.numpy as jnp
from jax.experimental import pallas as pl
from jax.experimental.pallas import tpu as pltpu


# --------------------------------------------------------------------------- #
# helpers
# --------------------------------------------------------------------------- #
def _round_up(x, m):
    return ((x + m - 1) // m) * m


def _cdiv(a, b):
    return (a + b - 1) // b


def _sublane(dtype):
    # rows per sublane tile: f32 -> 8, bf16 -> 16, int8/fp8 -> 32
    return {4: 8, 2: 16, 1: 32}[jnp.dtype(dtype).itemsize]


def _tpu_target():
    """Return (num_tensorcores_per_chip, vmem_limit_bytes) for this chip."""
    try:
        kind = jax.devices()[0].device_kind.lower()
    except Exception:
        kind = ""
    if "v7" in kind or "7x" in kind:
        # v7x: 2 TCs/chip, only 64 MiB VMEM per TC -> conservative cap.
        return 2, 45 * 1024 * 1024
    if "v6" in kind or "v5" in kind:
        # v5e / v6e: 1 TC/chip, 128 MiB VMEM -> raise the default scoped limit.
        return 1, 100 * 1024 * 1024
    # Unknown chip: stay conservative.
    return 1, 45 * 1024 * 1024


# --------------------------------------------------------------------------- #
# kernels
# --------------------------------------------------------------------------- #
def _fast_kernel(x_ref, w1_ref, b1_ref, w2_ref, b2_ref, o_ref):
    """Single hidden step: grid = (batch tiles,).  Weights resident (index_map
    constant), no accumulator scratch, output written once."""
    x = x_ref[...]
    h = jnp.dot(x.astype(w1_ref.dtype), w1_ref[...],
                preferred_element_type=jnp.float32)
    h = jnp.maximum(h + b1_ref[...].astype(jnp.float32), 0.0)
    y = jnp.dot(h.astype(w2_ref.dtype), w2_ref[...],
                preferred_element_type=jnp.float32)
    o_ref[...] = (x.astype(jnp.float32) + b2_ref[...].astype(jnp.float32) + y
                  ).astype(o_ref.dtype)


def _stream_body(x_ref, w1_ref, b1_ref, w2_ref, b2_ref, o_ref, acc_ref, xc_ref):
    """Grid = (batch tiles [parallel], hidden tiles [arbitrary/reduction])."""
    j = pl.program_id(1)

    @pl.when(j == 0)
    def _init():
        # Residual + output bias, and (optionally) the one-time x cast.
        acc_ref[...] = (x_ref[...].astype(jnp.float32)
                        + b2_ref[...].astype(jnp.float32))
        if xc_ref is not None:
            xc_ref[...] = x_ref[...].astype(xc_ref.dtype)

    x_op = xc_ref[...] if xc_ref is not None else x_ref[...]

    # fc1 chunk: (tb, Dp) @ (Dp, th) -> (tb, th), f32 accumulation on the MXU.
    h = jnp.dot(x_op, w1_ref[...], preferred_element_type=jnp.float32)
    h = jnp.maximum(h + b1_ref[...].astype(jnp.float32), 0.0)

    # fc2 chunk: (tb, th) @ (th, Dp) -> (tb, Dp), accumulated across hidden tiles.
    acc_ref[...] += jnp.dot(h.astype(w2_ref.dtype), w2_ref[...],
                            preferred_element_type=jnp.float32)

    @pl.when(j == pl.num_programs(1) - 1)
    def _finalize():
        o_ref[...] = acc_ref[...].astype(o_ref.dtype)


def _make_stream_kernel(cast_x):
    if cast_x:
        def kernel(x_ref, w1_ref, b1_ref, w2_ref, b2_ref, o_ref, acc_ref, xc_ref):
            _stream_body(x_ref, w1_ref, b1_ref, w2_ref, b2_ref, o_ref,
                         acc_ref, xc_ref)
    else:
        def kernel(x_ref, w1_ref, b1_ref, w2_ref, b2_ref, o_ref, acc_ref):
            _stream_body(x_ref, w1_ref, b1_ref, w2_ref, b2_ref, o_ref,
                         acc_ref, None)
    return kernel


# --------------------------------------------------------------------------- #
# VMEM footprint model & tile selection
# --------------------------------------------------------------------------- #
def _fast_footprint(tb, Dp, Hp, xb, wb, ob):
    f = 2 * tb * Dp * xb + 2 * tb * Dp * ob           # x / out tiles (2-buffered)
    f += 2 * (Dp * Hp + Hp * Dp + Hp + Dp) * wb       # W1, W2, b1, b2 buffers
    f += tb * Hp * 4 + tb * Dp * 4                    # live h / y intermediates
    return f


def _stream_footprint(tb, th, Dp, xb, wb, ob, cast_x):
    f = 2 * tb * Dp * xb + 2 * tb * Dp * ob           # x / out tiles (2-buffered)
    f += tb * Dp * 4                                  # f32 accumulator scratch
    if cast_x:
        f += tb * Dp * wb                             # cast-x scratch
    f += 2 * (Dp * th + th * Dp + th + Dp) * wb       # W1/W2/b1 blocks + b2
    f += tb * th * 4                                  # live fc1 activation
    return f


def _pick_th(Hp, tb, Dp, budget, xb, wb, ob, cast_x, max_th=4096):
    # Largest multiple of 128 that divides Hp and fits the per-step budget.
    for th in range(min(Hp, max_th), 0, -128):
        if Hp % th == 0 and _stream_footprint(tb, th, Dp, xb, wb, ob, cast_x) <= budget:
            return th
    return None


# --------------------------------------------------------------------------- #
# parameter preparation (done ONCE, not per forward call)
# --------------------------------------------------------------------------- #
def prepare_params(w1, b1, w2, b2):
    """Pre-pad weights to lane-dense (multiple-of-128) feature dims."""
    D, H = w1.shape
    assert H == 2 * D and w2.shape == (H, D)
    assert b1.shape == (1, H) and b2.shape == (1, D)
    Dp, Hp = _round_up(D, 128), _round_up(H, 128)
    # Zero padding contributes exactly 0 to both matmuls and both biases.
    return {
        "w1": jnp.pad(w1, ((0, Dp - D), (0, Hp - H))),
        "b1": jnp.pad(b1, ((0, 0), (0, Hp - H))),
        "w2": jnp.pad(w2, ((0, Hp - H), (0, Dp - D))),
        "b2": jnp.pad(b2, ((0, 0), (0, Dp - D))),
        "D": D,
        "H": H,
    }


# --------------------------------------------------------------------------- #
# forward
# --------------------------------------------------------------------------- #
def fairness_adjustment_forward(logits, params, *, max_tb=512, _force_stream_th=None):
    B, D = logits.shape
    assert D == params["D"]
    w1p, b1p, w2p, b2p = params["w1"], params["b1"], params["w2"], params["b2"]
    Dp, Hp = w1p.shape

    num_tc, vmem_limit = _tpu_target()
    budget = int(0.85 * vmem_limit)

    x_dt, w_dt, o_dt = logits.dtype, w1p.dtype, logits.dtype
    xb = jnp.dtype(x_dt).itemsize
    wb = jnp.dtype(w_dt).itemsize
    ob = jnp.dtype(o_dt).itemsize
    cast_x = jnp.dtype(x_dt) != jnp.dtype(w_dt)
    sub = max(_sublane(x_dt), _sublane(w_dt))

    # ---- batch tiling: balanced tiles, split only when the chip has >1 TC ---
    Bp0 = _round_up(B, sub)
    min_tiles = num_tc if Bp0 >= num_tc * sub else 1
    n_tiles = max(min_tiles, _cdiv(Bp0, max_tb))

    mode, th = None, None
    while True:
        tb = _round_up(_cdiv(Bp0, n_tiles), sub)
        if _force_stream_th is not None:            # debug/testing hook
            mode, th = "stream", int(_force_stream_th)
            assert Hp % th == 0
            break
        if _fast_footprint(tb, Dp, Hp, xb, wb, ob) <= budget:
            mode, th = "fast", Hp
            break
        th = _pick_th(Hp, tb, Dp, budget, xb, wb, ob, cast_x)
        if th is not None:
            mode = "stream"
            break
        if tb <= sub:
            mode, th = "stream", 128                # last resort: exceed soft budget
            break
        n_tiles += 1
    Bp = n_tiles * tb

    # Per-call activation padding only (weights were pre-padded once).
    xp = jnp.pad(logits, ((0, Bp - B), (0, Dp - D)))

    flops = 4 * Bp * Dp * Hp  # two matmuls, 2 flops/MAC
    w_bytes = (Dp * Hp + Hp * Dp + Hp) * wb          # W1 + W2 + b1
    act_bytes = Bp * Dp * (xb + ob)

    if mode == "fast":
        # Weights are DMA'd once total (constant index_map over the batch axis).
        bytes_accessed = act_bytes + w_bytes + Dp * wb
        out = pl.pallas_call(
            _fast_kernel,
            out_shape=jax.ShapeDtypeStruct((Bp, Dp), o_dt),
            grid_spec=pltpu.PrefetchScalarGridSpec(
                num_scalar_prefetch=0,
                grid=(Bp // tb,),
                in_specs=[
                    pl.BlockSpec((tb, Dp), lambda i: (i, 0)),   # logits tile
                    pl.BlockSpec((Dp, Hp), lambda i: (0, 0)),   # W1 (resident)
                    pl.BlockSpec((1, Hp), lambda i: (0, 0)),    # b1 (resident)
                    pl.BlockSpec((Hp, Dp), lambda i: (0, 0)),   # W2 (resident)
                    pl.BlockSpec((1, Dp), lambda i: (0, 0)),    # b2 (resident)
                ],
                out_specs=pl.BlockSpec((tb, Dp), lambda i: (i, 0)),
            ),
            compiler_params=pltpu.CompilerParams(
                dimension_semantics=("parallel",),
                vmem_limit_bytes=vmem_limit,
            ),
            cost_estimate=pl.CostEstimate(
                flops=flops, transcendentals=0, bytes_accessed=bytes_accessed),
        )(xp, w1p, b1p, w2p, b2p)
    else:
        # Weights are re-streamed once per batch tile (index_map depends on j).
        bytes_accessed = act_bytes + (Bp // tb) * w_bytes + Dp * wb
        scratch = [pltpu.VMEM((tb, Dp), jnp.float32)]
        if cast_x:
            scratch.append(pltpu.VMEM((tb, Dp), w_dt))
        out = pl.pallas_call(
            _make_stream_kernel(cast_x),
            out_shape=jax.ShapeDtypeStruct((Bp, Dp), o_dt),
            grid_spec=pltpu.PrefetchScalarGridSpec(
                num_scalar_prefetch=0,
                grid=(Bp // tb, Hp // th),
                in_specs=[
                    pl.BlockSpec((tb, Dp), lambda i, j: (i, 0)),  # logits tile
                    pl.BlockSpec((Dp, th), lambda i, j: (0, j)),  # W1 column block
                    pl.BlockSpec((1, th), lambda i, j: (0, j)),   # b1 chunk
                    pl.BlockSpec((th, Dp), lambda i, j: (j, 0)),  # W2 row block
                    pl.BlockSpec((1, Dp), lambda i, j: (0, 0)),   # b2 (constant)
                ],
                out_specs=pl.BlockSpec((tb, Dp), lambda i, j: (i, 0)),
                scratch_shapes=scratch,
            ),
            compiler_params=pltpu.CompilerParams(
                dimension_semantics=("parallel", "arbitrary"),
                vmem_limit_bytes=vmem_limit,
            ),
            cost_estimate=pl.CostEstimate(
                flops=flops, transcendentals=0, bytes_accessed=bytes_accessed),
        )(xp, w1p, b1p, w2p, b2p)

    return out[:B, :D]


# --------------------------------------------------------------------------- #
# init / reference
# --------------------------------------------------------------------------- #
def init_params(key, input_dim, dtype=jnp.float32):
    # Deterministic init mimicking nn.Linear's U(-1/sqrt(fan_in), 1/sqrt(fan_in)).
    D, H = input_dim, 2 * input_dim
    k1, k2, k3, k4 = jax.random.split(key, 4)
    bound1 = 1.0 / jnp.sqrt(D)
    bound2 = 1.0 / jnp.sqrt(H)
    # PyTorch stores weight as (out, in); we keep (in, out) so the kernel does x @ W.
    w1 = jax.random.uniform(k1, (D, H), dtype, -bound1, bound1)
    b1 = jax.random.uniform(k2, (1, H), dtype, -bound1, bound1)
    w2 = jax.random.uniform(k3, (H, D), dtype, -bound2, bound2)
    b2 = jax.random.uniform(k4, (1, D), dtype, -bound2, bound2)
    return w1, b1, w2, b2


def reference_forward(logits, w1, b1, w2, b2):
    h = jnp.maximum(logits @ w1 + b1, 0.0)
    return logits + (h @ w2 + b2)


# --------------------------------------------------------------------------- #
if __name__ == "__main__":
    key = jax.random.PRNGKey(0)
    kx1, kp1, kx2, kp2 = jax.random.split(key, 4)

    # ---- case 1: small model -> fast path (weights resident, no accumulator)
    B, D = 16, 32
    logits = jax.random.normal(kx1, (B, D), jnp.float32)
    w1, b1, w2, b2 = init_params(kp1, D)
    params = prepare_params(w1, b1, w2, b2)           # padded ONCE, reused per call

    fwd = jax.jit(lambda x: fairness_adjustment_forward(x, params))
    out = jax.block_until_ready(fwd(logits))
    ref = reference_forward(logits, w1, b1, w2, b2)
    assert out.shape == (B, D)
    assert jnp.allclose(out, ref, atol=1e-5, rtol=1e-5)

    # ---- case 2: exercise the streamed-hidden (accumulator) path ------------
    B2, D2 = 24, 128                                   # Hp = 256, th forced to 128
    logits2 = jax.random.normal(kx2, (B2, D2), jnp.float32)
    w1b, b1b, w2b, b2b = init_params(kp2, D2)
    params2 = prepare_params(w1b, b1b, w2b, b2b)
    out2 = jax.block_until_ready(
        fairness_adjustment_forward(logits2, params2, _force_stream_th=128))
    ref2 = reference_forward(logits2, w1b, b1b, w2b, b2b)
    assert out2.shape == (B2, D2)
    assert jnp.allclose(out2, ref2, atol=1e-4, rtol=1e-4)

    print("KERNEL_OK")
</pallas_src>

<mosaic_0001>
module attributes {stable_mosaic.version = 11 : i64} {
  func.func @_fast_kernel(%arg0: i32, %arg1: memref<16x128xf32, #tpu.memory_space<vmem>>, %arg2: memref<128x128xf32, #tpu.memory_space<vmem>>, %arg3: memref<1x128xf32, #tpu.memory_space<vmem>>, %arg4: memref<128x128xf32, #tpu.memory_space<vmem>>, %arg5: memref<1x128xf32, #tpu.memory_space<vmem>>, %arg6: memref<16x128xf32, #tpu.memory_space<vmem>>) attributes {dimension_semantics = [#tpu.dimension_semantics<parallel>], iteration_bounds = array<i64: 1>, scalar_prefetch = 0 : i64, scratch_operands = 0 : i64, tpu.core_type = #tpu.core_type<tc>, window_params = [{transform_indices = @transform_0, window_bounds = array<i64: 16, 128>}, {pipeline_mode = #tpu.pipeline_mode<synchronous>, transform_indices = @transform_1, window_bounds = array<i64: 128, 128>}, {pipeline_mode = #tpu.pipeline_mode<synchronous>, transform_indices = @transform_2, window_bounds = array<i64: 1, 128>}, {pipeline_mode = #tpu.pipeline_mode<synchronous>, transform_indices = @transform_3, window_bounds = array<i64: 128, 128>}, {pipeline_mode = #tpu.pipeline_mode<synchronous>, transform_indices = @transform_4, window_bounds = array<i64: 1, 128>}, {transform_indices = @transform_5, window_bounds = array<i64: 16, 128>}]} {
    %c0 = arith.constant 0 : index
    %c0_0 = arith.constant 0 : index
    %0 = vector.load %arg1[%c0, %c0_0] : memref<16x128xf32, #tpu.memory_space<vmem>>, vector<16x128xf32>
    %c0_1 = arith.constant 0 : index
    %c0_2 = arith.constant 0 : index
    %1 = vector.load %arg2[%c0_1, %c0_2] : memref<128x128xf32, #tpu.memory_space<vmem>>, vector<128x128xf32>
    %cst = arith.constant dense<0.000000e+00> : vector<16x128xf32>
    %2 = tpu.matmul %0, %1, %cst {dimension_numbers = #tpu.dot_dimension_numbers<[1], [0], [0], [1], [0, 0, 1, 1], [], []>} : vector<16x128xf32>, vector<128x128xf32>, vector<16x128xf32> -> vector<16x128xf32>
    %c0_3 = arith.constant 0 : index
    %c0_4 = arith.constant 0 : index
    %3 = vector.load %arg3[%c0_3, %c0_4] : memref<1x128xf32, #tpu.memory_space<vmem>>, vector<1x128xf32>
    %4 = vector.broadcast %3 : vector<1x128xf32> to vector<16x128xf32>
    %5 = arith.addf %2, %4 : vector<16x128xf32>
    %cst_5 = arith.constant 0.000000e+00 : f32
    %6 = vector.broadcast %cst_5 : f32 to vector<16x128xf32>
    %7 = arith.maximumf %5, %6 : vector<16x128xf32>
    %c0_6 = arith.constant 0 : index
    %c0_7 = arith.constant 0 : index
    %8 = vector.load %arg4[%c0_6, %c0_7] : memref<128x128xf32, #tpu.memory_space<vmem>>, vector<128x128xf32>
    %cst_8 = arith.constant dense<0.000000e+00> : vector<16x128xf32>
    %9 = tpu.matmul %7, %8, %cst_8 {dimension_numbers = #tpu.dot_dimension_numbers<[1], [0], [0], [1], [0, 0, 1, 1], [], []>} : vector<16x128xf32>, vector<128x128xf32>, vector<16x128xf32> -> vector<16x128xf32>
    %c0_9 = arith.constant 0 : index
    %c0_10 = arith.constant 0 : index
    %10 = vector.load %arg5[%c0_9, %c0_10] : memref<1x128xf32, #tpu.memory_space<vmem>>, vector<1x128xf32>
    %11 = vector.broadcast %10 : vector<1x128xf32> to vector<16x128xf32>
    %12 = arith.addf %0, %11 : vector<16x128xf32>
    %13 = arith.addf %12, %9 : vector<16x128xf32>
    %c0_11 = arith.constant 0 : index
    %c0_12 = arith.constant 0 : index
    %14 = vector.load %arg6[%c0_11, %c0_12] : memref<16x128xf32, #tpu.memory_space<vmem>>, vector<16x128xf32>
    tpu.vector_store %arg6[%c0_11, %c0_12], %13 {strides = array<i32>} : memref<16x128xf32, #tpu.memory_space<vmem>>, vector<16x128xf32>,
    return
  }
  func.func @transform_0(%arg0: i32) -> (i32, i32) {
    %c0_i32 = arith.constant 0 : i32
    %c0_i32_0 = arith.constant 0 : i32
    return %arg0, %c0_i32 : i32, i32
  }
  func.func @transform_1(%arg0: i32) -> (i32, i32) {
    %c0_i32 = arith.constant 0 : i32
    %c0_i32_0 = arith.constant 0 : i32
    %c0_i32_1 = arith.constant 0 : i32
    return %c0_i32, %c0_i32_0 : i32, i32
  }
  func.func @transform_2(%arg0: i32) -> (i32, i32) {
    %c0_i32 = arith.constant 0 : i32
    %c0_i32_0 = arith.constant 0 : i32
    %c0_i32_1 = arith.constant 0 : i32
    return %c0_i32, %c0_i32_0 : i32, i32
  }
  func.func @transform_3(%arg0: i32) -> (i32, i32) {
    %c0_i32 = arith.constant 0 : i32
    %c0_i32_0 = arith.constant 0 : i32
    %c0_i32_1 = arith.constant 0 : i32
    return %c0_i32, %c0_i32_0 : i32, i32
  }
  func.func @transform_4(%arg0: i32) -> (i32, i32) {
    %c0_i32 = arith.constant 0 : i32
    %c0_i32_0 = arith.constant 0 : i32
    %c0_i32_1 = arith.constant 0 : i32
    return %c0_i32, %c0_i32_0 : i32, i32
  }
  func.func @transform_5(%arg0: i32) -> (i32, i32) {
    %c0_i32 = arith.constant 0 : i32
    %c0_i32_0 = arith.constant 0 : i32
    return %arg0, %c0_i32 : i32, i32
  }
}

</mosaic_0001>

<llo_original>
// kernel: _lambda_.1
$region0: #{_lambda_.1}
  #allocation0 [shape = 'u32[]', space=smem, size = 0x4, offset = 0x4, fixed_abs, tag = 'smem constant byte address 0x4 - core index']
  #allocation1 [shape = 'u32[144,128]{1,0:T(1,128)}', space=vmem, size = 0x12000, scoped, tag = 'internal scratch']
  %s0 = inlined_call_operand.vmem [shape: f32[16,128], index: 0, kind: input, shape index: {}]
  %s1 = inlined_call_operand.hbm [shape: f32[128,128], index: 1, kind: input, shape index: {}]
  %s2 = inlined_call_operand.vmem [shape: f32[1,128], index: 2, kind: input, shape index: {}]
  %s3 = inlined_call_operand.hbm [shape: f32[128,128], index: 3, kind: input, shape index: {}]
  %s4 = inlined_call_operand.vmem [shape: f32[1,128], index: 4, kind: input, shape index: {}]
  %s5 = inlined_call_operand.hbm [shape: f32[16,128], index: 5, kind: output, shape index: {}]
  %s6 = sld [smem:[#allocation0]]
  $region38: #{_lambda_.1} parent=0
    _
  %s8 = ssub.s32 1, %s6
  %s9 = scalar_select 0, %s8, %s6
  $region1: #{_lambda_.1} parent=0
    #allocation2 [shape = 'u8[65536]{0}', space=vmem, size = 0x10000, scoped, tag = 'input window, operand 1, single buffered']
    #allocation3 [shape = 's32[1]{0}', space=sflag, size = 0x4, scoped, tag = 'scoped memory for _lambda_.1']
    #allocation4 [shape = 's32[1]{0}', space=sflag, size = 0x4, scoped, tag = 'scoped memory for _lambda_.1']
    #allocation5 [shape = 'u8[65536]{0}', space=vmem, size = 0x10000, scoped, tag = 'input window, operand 3, single buffered']
    #allocation6 [shape = 's32[1]{0}', space=sflag, size = 0x4, scoped, tag = 'scoped memory for _lambda_.1']
    #allocation7 [shape = 'u8[8192]{0}', space=vmem, size = 0x2000, scoped, tag = 'output window, operand 0, single buffered']
    %10 = vsyncpa [#allocation3], 0
    %11 = vsyncpa [#allocation6], 0
    %12 = vsyncpa [#allocation4], 0
    // Predicated region
    $region2: #{_lambda_.1} parent=1 // pred_check
      _
    $region3: #{_lambda_.1} parent=1 // pred_check_branch
      %14 = sbr.rel (0) target = $region5
    $region4: #{_lambda_.1} parent=1 // pred_region
      _
    $region5: #{_lambda_.1} parent=1 // pred_fallthru
      _
    // Predicated region
    $region6: #{_lambda_.1} parent=1 // pred_check
      _
    $region7: #{_lambda_.1} parent=1 // pred_check_branch
      %16 = sbr.rel (0) target = $region9
    $region8: #{_lambda_.1} parent=1 // pred_region
      %s18 = ssub.s32 2048, 2048
      %19 = vsyncadd [#allocation3], %s18
      %s20 = sshll.u32 [#allocation2], 4
      %s21 = int_to_ptr.vmem [resolvable:$true] %s20
      %26 = dma.hbm_to_vmem [thread:$0]  %s1, 2048, %s21, [#allocation3], 128, 128, 8
    $region9: #{_lambda_.1} parent=1 // pred_fallthru
      _
    // Predicated region
    $region10: #{_lambda_.1} parent=1 // pred_check
      _
    $region11: #{_lambda_.1} parent=1 // pred_check_branch
      %28 = sbr.rel (0) target = $region13
    $region12: #{_lambda_.1} parent=1 // pred_region
      _
    $region13: #{_lambda_.1} parent=1 // pred_fallthru
      _
    // Predicated region
    $region14: #{_lambda_.1} parent=1 // pred_check
      _
    $region15: #{_lambda_.1} parent=1 // pred_check_branch
      %30 = sbr.rel (0) target = $region17
    $region16: #{_lambda_.1} parent=1 // pred_region
      %s32 = ssub.s32 2048, 2048
      %33 = vsyncadd [#allocation6], %s32
      %s34 = sshll.u32 [#allocation5], 4
      %s35 = int_to_ptr.vmem [resolvable:$true] %s34
      %40 = dma.hbm_to_vmem [thread:$0]  %s3, 2048, %s35, [#allocation6], 128, 128, 8
    $region17: #{_lambda_.1} parent=1 // pred_fallthru
      _
    // Predicated region
    $region18: #{_lambda_.1} parent=1 // pred_check
      _
    $region19: #{_lambda_.1} parent=1 // pred_check_branch
      %42 = sbr.rel (0) target = $region21
    $region20: #{_lambda_.1} parent=1 // pred_region
      _
    $region21: #{_lambda_.1} parent=1 // pred_fallthru
      _
    // Predicated region
    $region22: #{_lambda_.1} parent=1 // pred_check
      _
    $region23: #{_lambda_.1} parent=1 // pred_check_branch
      %44 = sbr.rel (0) target = $region25
    $region24: #{_lambda_.1} parent=1 // pred_region
      %45 = dma.done [#allocation3], 2048
    $region25: #{_lambda_.1} parent=1 // pred_fallthru
      _
    // Predicated region
    $region26: #{_lambda_.1} parent=1 // pred_check
      _
    $region27: #{_lambda_.1} parent=1 // pred_check_branch
      %47 = sbr.rel (0) target = $region29
    $region28: #{_lambda_.1} parent=1 // pred_region
      %48 = dma.done [#allocation6], 2048
    $region29: #{_lambda_.1} parent=1 // pred_fallthru
      _
    %v49 = vld [vmem:[%s0] sm:$0xff]
    %v50 = vld [vmem:[%s0 + $0x8] sm:$0xff]
    %v51 = vld [vmem:[#allocation2] sm:$0xff]
    %v52 = vld [vmem:[#allocation2 + $0x8] sm:$0xff]
    %v53 = vld [vmem:[#allocation2 + $0x10] sm:$0xff]
    %v54 = vld [vmem:[#allocation2 + $0x18] sm:$0xff]
    %v55 = vld [vmem:[#allocation2 + $0x20] sm:$0xff]
    %v56 = vld [vmem:[#allocation2 + $0x28] sm:$0xff]
    %v57 = vld [vmem:[#allocation2 + $0x30] sm:$0xff]
    %v58 = vld [vmem:[#allocation2 + $0x38] sm:$0xff]
    %v59 = vld [vmem:[#allocation2 + $0x40] sm:$0xff]
    %v60 = vld [vmem:[#allocation2 + $0x48] sm:$0xff]
    %v61 = vld [vmem:[#allocation2 + $0x50] sm:$0xff]
    %v62 = vld [vmem:[#allocation2 + $0x58] sm:$0xff]
    %v63 = vld [vmem:[#allocation2 + $0x60] sm:$0xff]
    %v64 = vld [vmem:[#allocation2 + $0x68] sm:$0xff]
    %v65 = vld [vmem:[#allocation2 + $0x70] sm:$0xff]
    %v66 = vld [vmem:[#allocation2 + $0x78] sm:$0xff]
    %v67 = vld [vmem:[%s2] sm:$0x1]
    %v69 = vlaneseq
    %v70 = vshrl.u32 %v69, 7
    %v71 = vsub.s32 0, %v70
    %v72 = vrot.slane %v67, %v71
    %74 = vmatprep.subr.mxu0 0.0
    %75 = vmatpush1.msra.mxu0 %v51
    %76 = vmatprep.subr.mxu0 0.0
    %77 = vmatpush1.msra.mxu0 %v52
    %78 = vmatprep.subr.mxu0 0.0
    %79 = vmatpush1.msra.mxu0 %v53
    %80 = vmatprep.subr.mxu0 0.0
    %81 = vmatpush1.msra.mxu0 %v54
    %82 = vmatprep.subr.mxu0 0.0
    %83 = vmatpush1.msra.mxu0 %v55
    %84 = vmatprep.subr.mxu0 0.0
    %85 = vmatpush1.msra.mxu0 %v56
    %86 = vmatprep.subr.mxu0 0.0
    %87 = vmatpush1.msra.mxu0 %v57
    %88 = vmatprep.subr.mxu0 0.0
    %89 = vmatpush1.msra.mxu0 %v58
    %90 = vmatprep.subr.mxu0 0.0
    %91 = vmatpush1.msra.mxu0 %v59
    %92 = vmatprep.subr.mxu0 0.0
    %93 = vmatpush1.msra.mxu0 %v60
    %94 = vmatprep.subr.mxu0 0.0
    %95 = vmatpush1.msra.mxu0 %v61
    %96 = vmatprep.subr.mxu0 0.0
    %97 = vmatpush1.msra.mxu0 %v62
    %98 = vmatprep.subr.mxu0 0.0
    %99 = vmatpush1.msra.mxu0 %v63
    %100 = vmatprep.subr.mxu0 0.0
    %101 = vmatpush1.msra.mxu0 %v64
    %102 = vmatprep.subr.mxu0 0.0
    %103 = vmatpush1.msra.mxu0 %v65
    %104 = vmatprep.subr.mxu0 0.0
    %105 = vmatpush1.msra.mxu0 %v66
    %106 = vmatprep.subr.mxu0 0.0
    %107 = vmatpush1.msra.mxu0 0.0
    %108 = vmatprep.subr.mxu0 0.0
    %109 = vmatpush1.msra.mxu0 0.0
    %110 = vmatprep.subr.mxu0 0.0
    %111 = vmatpush1.msra.mxu0 0.0
    %112 = vmatprep.subr.mxu0 0.0
    %113 = vmatpush1.msra.mxu0 0.0
    %114 = vmatprep.subr.mxu0 0.0
    %115 = vmatpush1.msra.mxu0 0.0
    %116 = vmatprep.subr.mxu0 0.0
    %117 = vmatpush1.msra.mxu0 0.0
    %118 = vmatprep.subr.mxu0 0.0
    %119 = vmatpush1.msra.mxu0 0.0
    %120 = vmatprep.subr.mxu0 0.0
    %121 = vmatpush1.msra.mxu0 0.0
    %122 = vmatprep.subr.mxu0 0.0
    %123 = vmatpush1.msra.mxu0 0.0
    %124 = vmatprep.subr.mxu0 0.0
    %125 = vmatpush1.msra.mxu0 0.0
    %126 = vmatprep.subr.mxu0 0.0
    %127 = vmatpush1.msra.mxu0 0.0
    %128 = vmatprep.subr.mxu0 0.0
    %129 = vmatpush1.msra.mxu0 0.0
    %130 = vmatprep.subr.mxu0 0.0
    %131 = vmatpush1.msra.mxu0 0.0
    %132 = vmatprep.subr.mxu0 0.0
    %133 = vmatpush1.msra.mxu0 0.0
    %134 = vmatprep.subr.mxu0 0.0
    %135 = vmatpush1.msra.mxu0 0.0
    %136 = vmatprep.subr.mxu0 0.0
    %137 = vmatpush1.msra.mxu0 0.0
    %138 = vmatprep.mubr.f32.mxu0 0.0
    %139 = vmatmul.mubr.f32.gmra.mrb[0].mxu0 %v49
    %v140 = vpop.f32.mrb[0].mxu0
    %v141 = vadd.f32 %v72, %v140
    %v142 = vpop.f32.mrb[0].mxu0
    %143 = vmatprep.mubr.f32.mxu0 0.0
    %144 = vmatmul.mubr.f32.gmra.mrb[0].mxu0 %v50
    %v145 = vpop.f32.mrb[0].mxu0
    %v146 = vadd.f32 %v72, %v145
    %v147 = vpop.f32.mrb[0].mxu0
    %148 = vdwg.mxu0
    %v149 = vmax.f32 %v141, 0.0
    %v150 = vmax.f32 %v146, 0.0
    %v151 = vld [vmem:[#allocation5] sm:$0xff]
    %v152 = vld [vmem:[#allocation5 + $0x8] sm:$0xff]
    %v153 = vld [vmem:[#allocation5 + $0x10] sm:$0xff]
    %v154 = vld [vmem:[#allocation5 + $0x18] sm:$0xff]
    %v155 = vld [vmem:[#allocation5 + $0x20] sm:$0xff]
    %v156 = vld [vmem:[#allocation5 + $0x28] sm:$0xff]
    %v157 = vld [vmem:[#allocation5 + $0x30] sm:$0xff]
    %v158 = vld [vmem:[#allocation5 + $0x38] sm:$0xff]
    %v159 = vld [vmem:[#allocation5 + $0x40] sm:$0xff]
    %v160 = vld [vmem:[#allocation5 + $0x48] sm:$0xff]
    %v161 = vld [vmem:[#allocation5 + $0x50] sm:$0xff]
    %v162 = vld [vmem:[#allocation5 + $0x58] sm:$0xff]
    %v163 = vld [vmem:[#allocation5 + $0x60] sm:$0xff]
    %v164 = vld [vmem:[#allocation5 + $0x68] sm:$0xff]
    %v165 = vld [vmem:[#allocation5 + $0x70] sm:$0xff]
    %v166 = vld [vmem:[#allocation5 + $0x78] sm:$0xff]
    %167 = vmatprep.subr.mxu0 0.0
    %168 = vmatpush1.msra.mxu0 %v151
    %169 = vmatprep.subr.mxu0 0.0
    %170 = vmatpush1.msra.mxu0 %v152
    %171 = vmatprep.subr.mxu0 0.0
    %172 = vmatpush1.msra.mxu0 %v153
    %173 = vmatprep.subr.mxu0 0.0
    %174 = vmatpush1.msra.mxu0 %v154
    %175 = vmatprep.subr.mxu0 0.0
    %176 = vmatpush1.msra.mxu0 %v155
    %177 = vmatprep.subr.mxu0 0.0
    %178 = vmatpush1.msra.mxu0 %v156
    %179 = vmatprep.subr.mxu0 0.0
    %180 = vmatpush1.msra.mxu0 %v157
    %181 = vmatprep.subr.mxu0 0.0
    %182 = vmatpush1.msra.mxu0 %v158
    %183 = vmatprep.subr.mxu0 0.0
    %184 = vmatpush1.msra.mxu0 %v159
    %185 = vmatprep.subr.mxu0 0.0
    %186 = vmatpush1.msra.mxu0 %v160
    %187 = vmatprep.subr.mxu0 0.0
    %188 = vmatpush1.msra.mxu0 %v161
    %189 = vmatprep.subr.mxu0 0.0
    %190 = vmatpush1.msra.mxu0 %v162
    %191 = vmatprep.subr.mxu0 0.0
    %192 = vmatpush1.msra.mxu0 %v163
    %193 = vmatprep.subr.mxu0 0.0
    %194 = vmatpush1.msra.mxu0 %v164
    %195 = vmatprep.subr.mxu0 0.0
    %196 = vmatpush1.msra.mxu0 %v165
    %197 = vmatprep.subr.mxu0 0.0
    %198 = vmatpush1.msra.mxu0 %v166
    %199 = vmatprep.subr.mxu0 0.0
    %200 = vmatpush1.msra.mxu0 0.0
    %201 = vmatprep.subr.mxu0 0.0
    %202 = vmatpush1.msra.mxu0 0.0
    %203 = vmatprep.subr.mxu0 0.0
    %204 = vmatpush1.msra.mxu0 0.0
    %205 = vmatprep.subr.mxu0 0.0
    %206 = vmatpush1.msra.mxu0 0.0
    %207 = vmatprep.subr.mxu0 0.0
    %208 = vmatpush1.msra.mxu0 0.0
    %209 = vmatprep.subr.mxu0 0.0
    %210 = vmatpush1.msra.mxu0 0.0
    %211 = vmatprep.subr.mxu0 0.0
    %212 = vmatpush1.msra.mxu0 0.0
    %213 = vmatprep.subr.mxu0 0.0
    %214 = vmatpush1.msra.mxu0 0.0
    %215 = vmatprep.subr.mxu0 0.0
    %216 = vmatpush1.msra.mxu0 0.0
    %217 = vmatprep.subr.mxu0 0.0
    %218 = vmatpush1.msra.mxu0 0.0
    %219 = vmatprep.subr.mxu0 0.0
    %220 = vmatpush1.msra.mxu0 0.0
    %221 = vmatprep.subr.mxu0 0.0
    %222 = vmatpush1.msra.mxu0 0.0
    %223 = vmatprep.subr.mxu0 0.0
    %224 = vmatpush1.msra.mxu0 0.0
    %225 = vmatprep.subr.mxu0 0.0
    %226 = vmatpush1.msra.mxu0 0.0
    %227 = vmatprep.subr.mxu0 0.0
    %228 = vmatpush1.msra.mxu0 0.0
    %229 = vmatprep.subr.mxu0 0.0
    %230 = vmatpush1.msra.mxu0 0.0
    %231 = vmatprep.mubr.f32.mxu0 0.0
    %232 = vmatmul.mubr.f32.gmra.mrb[0].mxu0 %v149
    %v233 = vpop.f32.mrb[0].mxu0
    %v234 = vadd.f32 0.0, %v233
    %v235 = vpop.f32.mrb[0].mxu0
    %236 = vmatprep.mubr.f32.mxu0 0.0
    %237 = vmatmul.mubr.f32.gmra.mrb[0].mxu0 %v150
    %v238 = vpop.f32.mrb[0].mxu0
    %v239 = vadd.f32 0.0, %v238
    %v240 = vpop.f32.mrb[0].mxu0
    %241 = vdwg.mxu0
    %v242 = vld [vmem:[%s4] sm:$0x1]
    %v244 = vlaneseq
    %v245 = vshrl.u32 %v244, 7
    %v246 = vsub.s32 0, %v245
    %v247 = vrot.slane %v242, %v246
    %v249 = vadd.f32 %v49, %v247
    %v250 = vadd.f32 %v50, %v247
    %v251 = vadd.f32 %v249, %v234
    %v252 = vadd.f32 %v250, %v239
    %253 = vst [vmem:[#allocation7] sm:$0xff] %v251
    %254 = vst [vmem:[#allocation7 + $0x8] sm:$0xff] %v252
    // Predicated region
    $region30: #{_lambda_.1} parent=1 // pred_check
      _
    $region31: #{_lambda_.1} parent=1 // pred_check_branch
      %256 = sbr.rel (0) target = $region33
    $region32: #{_lambda_.1} parent=1 // pred_region
      %s258 = ssub.s32 256, 256
      %259 = vsyncadd [#allocation4], %s258
      %s260 = sshll.u32 [#allocation7], 4
      %s261 = int_to_ptr.vmem [resolvable:$true] %s260
      %266 = dma.vmem_to_hbm [thread:$0]  %s261, 256, %s5, [#allocation4], 128, 128, 8
    $region33: #{_lambda_.1} parent=1 // pred_fallthru
      _
    // Predicated region
    $region34: #{_lambda_.1} parent=1 // pred_check
      _
    $region35: #{_lambda_.1} parent=1 // pred_check_branch
      %268 = sbr.rel (0) target = $region37
    $region36: #{_lambda_.1} parent=1 // pred_region
      %269 = dma.done [#allocation4], 256
    $region37: #{_lambda_.1} parent=1 // pred_fallthru
      _
    %270 = vsyncpa [#allocation3], 1
    %271 = vsyncpa [#allocation6], 1
    %272 = vsyncpa [#allocation4], 1

</llo_original>
